<compile_context>
chip_gen: v7x
topology: tpu7x:2x2x1
jax: 0.10.0
libtpu: 0.0.40
codegen_flags: <defaults>
</compile_context>

<pallas_src>
import functools

import jax
import jax.numpy as jnp
from jax import lax
from jax.experimental import pallas as pl
from jax.experimental.pallas import tpu as pltpu

LN_EPS = 1e-5
_DEFAULT_SCOPED_VMEM = 16 * 1024 * 1024  # conservative (v5e default scoped limit)


def _compiler_params(n_grid_axes, vmem_bytes_needed=0):
    kw = dict(dimension_semantics=("parallel",) * n_grid_axes)
    if vmem_bytes_needed > _DEFAULT_SCOPED_VMEM:
        # keep big row tiles double-buffered on v5e/v6e; clamp well under v7x's 64 MiB physical
        kw["vmem_limit_bytes"] = int(min(vmem_bytes_needed, 48 * 1024 * 1024))
    return pltpu.CompilerParams(**kw)


def _row_tile(m, target=512):
    """Row tile for mem-bound row kernels: full extent when small, else the largest
    multiple-of-8 divisor <= target (callers pad m so one always exists)."""
    if m <= target:
        return m
    t = target - (target % 8)
    while t >= 8:
        if m % t == 0:
            return t
        t -= 8
    return target  # only reachable if the caller forgot to pad


def _seq_tile(s, target=256):
    if s <= target:
        return s
    t = target - (target % 8)
    while t >= 8:
        if s % t == 0:
            return t
        t -= 8
    return s


def _pad_rows(x, mult):
    pad = (-x.shape[0]) % mult
    if pad:
        x = jnp.pad(x, ((0, pad), (0, 0)))
    return x


# ----------------------------------------------------------------------------
# Pallas kernels
# ----------------------------------------------------------------------------
def _matmul_kernel(x_ref, w_ref, o_ref):
    o_ref[...] = jnp.dot(x_ref[...].astype(jnp.bfloat16), w_ref[...],
                         preferred_element_type=jnp.float32).astype(o_ref.dtype)


def pallas_matmul(x, w_b16, out_dtype=jnp.float32):
    """Row-tiled, bias-less x @ w (w already bf16)."""
    M, K = x.shape
    N = w_b16.shape[1]
    tm = _row_tile(M)
    est = 2 * (tm * K * 4 + int(w_b16.size) * 2 + tm * N * 4)
    return pl.pallas_call(
        _matmul_kernel,
        grid=(M // tm,),
        in_specs=[pl.BlockSpec((tm, K), lambda i: (i, 0)),
                  pl.BlockSpec((K, N), lambda i: (0, 0))],
        out_specs=pl.BlockSpec((tm, N), lambda i: (i, 0)),
        out_shape=jax.ShapeDtypeStruct((M, N), out_dtype),
        compiler_params=_compiler_params(1, est),
    )(x, w_b16)


def _qkv_proj_kernel(x_ref, w_ref, q_ref, k_ref, v_ref, *, hdh, dh):
    # One pass over the activation tile for q + shared-kv; outputs go straight into separate
    # q / k_self / v_self buffers (no wrapper-side column slices or concats afterwards).
    y = jnp.dot(x_ref[...].astype(jnp.bfloat16), w_ref[...],
                preferred_element_type=jnp.float32)
    q_ref[...] = y[:, :hdh].astype(q_ref.dtype)
    k_ref[...] = y[:, hdh:hdh + dh].astype(k_ref.dtype)
    v_ref[...] = y[:, hdh + dh:hdh + 2 * dh].astype(v_ref.dtype)


def pallas_qkv_proj(x2d, w_qkv_b16, n_head, d_head):
    M, D = x2d.shape
    hdh = n_head * d_head
    tm = _row_tile(M)
    est = 2 * (tm * D * 4 + int(w_qkv_b16.size) * 2 + tm * (hdh + 2 * d_head) * 2)
    return pl.pallas_call(
        functools.partial(_qkv_proj_kernel, hdh=hdh, dh=d_head),
        grid=(M // tm,),
        in_specs=[pl.BlockSpec((tm, D), lambda i: (i, 0)),
                  pl.BlockSpec((D, hdh + 2 * d_head), lambda i: (0, 0))],
        out_specs=(pl.BlockSpec((tm, hdh), lambda i: (i, 0)),
                   pl.BlockSpec((tm, d_head), lambda i: (i, 0)),
                   pl.BlockSpec((tm, d_head), lambda i: (i, 0))),
        out_shape=(jax.ShapeDtypeStruct((M, hdh), jnp.bfloat16),
                   jax.ShapeDtypeStruct((M, d_head), jnp.bfloat16),
                   jax.ShapeDtypeStruct((M, d_head), jnp.bfloat16)),
        compiler_params=_compiler_params(1, est),
    )(x2d, w_qkv_b16)


def _attn_kernel(q_ref, ks_ref, vs_ref, mk_ref, mv_ref, pm_ref, ps_ref, o_ref,
                 *, n_head, d_head, scale):
    # Shared single-head kv; pos bias + softmax scale folded into the (small) keys, which are
    # transposed ONCE per step so each head's QK^T is a plain (tq,Dh)x(Dh,K) matmul with the
    # key axis lane-dense.  Memory and self keys stay separate (no in-VMEM concat): the
    # softmax runs jointly over both score blocks.
    kmT = (((mk_ref[0].astype(jnp.float32) + pm_ref[...]) * scale).T).astype(jnp.bfloat16)
    ksT = (((ks_ref[...].astype(jnp.float32) + ps_ref[...]) * scale).T).astype(jnp.bfloat16)
    vm = mv_ref[0]
    vs = vs_ref[...]
    q = q_ref[...]
    for h in range(n_head):  # small static head count. TODO(synk): batch heads into one MXU call for large H.
        qh = q[:, h * d_head:(h + 1) * d_head]                                    # (tq, Dh)
        sm = jnp.dot(qh, kmT, preferred_element_type=jnp.float32)                 # (tq, Km)
        ss = jnp.dot(qh, ksT, preferred_element_type=jnp.float32)                 # (tq, S)
        m = jnp.maximum(jnp.max(sm, axis=-1, keepdims=True),
                        jnp.max(ss, axis=-1, keepdims=True))
        pm = jnp.exp(sm - m)
        ps = jnp.exp(ss - m)
        inv = pl.reciprocal(jnp.sum(pm, axis=-1, keepdims=True)
                            + jnp.sum(ps, axis=-1, keepdims=True), approx=True)
        out = (jnp.dot(pm.astype(jnp.bfloat16), vm, preferred_element_type=jnp.float32)
               + jnp.dot(ps.astype(jnp.bfloat16), vs, preferred_element_type=jnp.float32)) * inv
        # stream each head straight into its lane slice of the output block
        o_ref[:, h * d_head:(h + 1) * d_head] = out.astype(o_ref.dtype)


def pallas_attention(q, k_self, v_self, mem_k, mem_v, pos_mem, pos_self,
                     B, S, n_head, d_head, scale):
    M, hdh = q.shape
    Km = mem_k.shape[1]
    tq = _seq_tile(S)
    # TODO(synk): S not a multiple of 8 (with B > 1) needs padded-S plus key masking.
    assert S % 8 == 0 or B == 1, "flat row layout needs S % 8 == 0 (or B == 1)"
    nq = S // tq
    est = 2 * (tq * hdh * 2 * 2 + 2 * S * d_head * 2 + 2 * Km * d_head * 2
               + (Km + S) * d_head * 4)
    return pl.pallas_call(
        functools.partial(_attn_kernel, n_head=n_head, d_head=d_head, scale=scale),
        grid=(B, nq),
        in_specs=[
            pl.BlockSpec((tq, hdh), lambda b, i: (b * nq + i, 0)),    # q rows of batch b
            pl.BlockSpec((S, d_head), lambda b, i: (b, 0)),           # self keys of batch b
            pl.BlockSpec((S, d_head), lambda b, i: (b, 0)),           # self values of batch b
            pl.BlockSpec((1, Km, d_head), lambda b, i: (b, 0, 0)),    # memory keys
            pl.BlockSpec((1, Km, d_head), lambda b, i: (b, 0, 0)),    # memory values
            pl.BlockSpec((Km, d_head), lambda b, i: (0, 0)),          # pos bias (memory part)
            pl.BlockSpec((S, d_head), lambda b, i: (0, 0)),           # pos bias (self part)
        ],
        out_specs=pl.BlockSpec((tq, hdh), lambda b, i: (b * nq + i, 0)),
        out_shape=jax.ShapeDtypeStruct((M, hdh), jnp.bfloat16),
        compiler_params=_compiler_params(2, est),
    )(q, k_self, v_self, mem_k, mem_v, pos_mem, pos_self)


def _layer_epilogue_kernel(lw_ref, attn_ref, wo_ref, x_ref, g1_ref, be1_ref,
                           w1_ref, b1_ref, w2_ref, b2_ref, g2_ref, be2_ref,
                           agg_ref, o_ref, agg_out_ref):
    # Fused: attn @ w_o + residual + LN1 + ReLU-MLP + residual + LN2 + layer-weighted
    # aggregation -- a single HBM round-trip over the (tm, D) activation tile per layer.
    x = x_ref[...]                                                           # (tm, D) f32
    y = jnp.dot(attn_ref[...], wo_ref[...], preferred_element_type=jnp.float32) + x
    mu = jnp.mean(y, axis=-1, keepdims=True)
    var = jnp.mean((y - mu) ** 2, axis=-1, keepdims=True)
    h0 = (y - mu) * lax.rsqrt(var + LN_EPS) * g1_ref[...] + be1_ref[...]     # LN1 out

    h = jnp.dot(h0.astype(jnp.bfloat16), w1_ref[...],
                preferred_element_type=jnp.float32) + b1_ref[...]
    h = jnp.maximum(h, 0.0)
    y2 = jnp.dot(h.astype(jnp.bfloat16), w2_ref[...],
                 preferred_element_type=jnp.float32) + b2_ref[...] + h0
    mu2 = jnp.mean(y2, axis=-1, keepdims=True)
    var2 = jnp.mean((y2 - mu2) ** 2, axis=-1, keepdims=True)
    out = (y2 - mu2) * lax.rsqrt(var2 + LN_EPS) * g2_ref[...] + be2_ref[...]

    o_ref[...] = out
    agg_out_ref[...] = agg_ref[...] + lw_ref[0] * out


def pallas_layer_epilogue(attn2d, x2d, agg2d, lw_scalar, lp):
    M, D = x2d.shape
    hdh = attn2d.shape[1]
    Di = lp["w1_b16"].shape[1]
    tm = _row_tile(M)
    # double-buffered bf16 weights + f32 activation tiles (x, agg, out, agg_out) + h + attn
    est = (2 * 2 * (int(lp["wo_b16"].size) + int(lp["w1_b16"].size) + int(lp["w2_b16"].size))
           + 2 * (4 * tm * D * 4 + tm * hdh * 2 + tm * Di * 4))
    # TODO(synk): on v7x (64 MiB VMEM) with large d_model/d_inner, single-buffer the weight
    #             BlockSpecs (pipeline_mode=pl.Buffered(1)) or add a d_inner grid axis.
    return pl.pallas_call(
        _layer_epilogue_kernel,
        grid=(M // tm,),
        in_specs=[
            pl.BlockSpec(memory_space=pltpu.MemorySpace.SMEM),       # layer-weight scalar
            pl.BlockSpec((tm, hdh), lambda i: (i, 0)),               # attention output (bf16)
            pl.BlockSpec((hdh, D), lambda i: (0, 0)),                # w_o (bf16)
            pl.BlockSpec((tm, D), lambda i: (i, 0)),                 # residual stream x (f32)
            pl.BlockSpec((1, D), lambda i: (0, 0)),                  # ln1 gamma
            pl.BlockSpec((1, D), lambda i: (0, 0)),                  # ln1 beta
            pl.BlockSpec((D, Di), lambda i: (0, 0)),                 # w1 (bf16)
            pl.BlockSpec((1, Di), lambda i: (0, 0)),                 # b1
            pl.BlockSpec((Di, D), lambda i: (0, 0)),                 # w2 (bf16)
            pl.BlockSpec((1, D), lambda i: (0, 0)),                  # b2
            pl.BlockSpec((1, D), lambda i: (0, 0)),                  # ln2 gamma
            pl.BlockSpec((1, D), lambda i: (0, 0)),                  # ln2 beta
            pl.BlockSpec((tm, D), lambda i: (i, 0)),                 # running aggregate (aliased)
        ],
        out_specs=(pl.BlockSpec((tm, D), lambda i: (i, 0)),
                   pl.BlockSpec((tm, D), lambda i: (i, 0))),
        out_shape=(jax.ShapeDtypeStruct((M, D), jnp.float32),
                   jax.ShapeDtypeStruct((M, D), jnp.float32)),
        input_output_aliases={12: 1},
        compiler_params=_compiler_params(1, est),
    )(lw_scalar, attn2d, lp["wo_b16"], x2d,
      lp["ln1_g2d"], lp["ln1_b2d"], lp["w1_b16"], lp["b1_2d"],
      lp["w2_b16"], lp["b2_2d"], lp["ln2_g2d"], lp["ln2_b2d"], agg2d)


# ----------------------------------------------------------------------------
# Feedback model (JAX glue around the Pallas kernels)
# ----------------------------------------------------------------------------
def prepare_weights(params):
    """One-time weight prep (hoisted out of the forward): per-layer w_q||w_kv concat plus all
    f32->bf16 casts and (1, D)-shaped bias/LN views for lane-broadcast BlockSpecs."""
    w_kv = params["w_kv"]
    D = w_kv.shape[0]
    layers = []
    for lp in params["layers"]:
        Di = lp["w1"].shape[1]
        layers.append({
            "w_qkv_b16": jnp.concatenate([lp["w_q"], w_kv], axis=1).astype(jnp.bfloat16),
            "wo_b16": lp["w_o"].astype(jnp.bfloat16),
            "w1_b16": lp["w1"].astype(jnp.bfloat16),
            "b1_2d": lp["b1"].reshape(1, Di),
            "w2_b16": lp["w2"].astype(jnp.bfloat16),
            "b2_2d": lp["b2"].reshape(1, D),
            "ln1_g2d": lp["ln1_g"].reshape(1, D),
            "ln1_b2d": lp["ln1_b"].reshape(1, D),
            "ln2_g2d": lp["ln2_g"].reshape(1, D),
            "ln2_b2d": lp["ln2_b"].reshape(1, D),
        })
    return {"layers": layers,
            "w_kv_b16": w_kv.astype(jnp.bfloat16),
            "n_head": params["n_head"],
            "d_head": params["d_head"],
            "mem_len": params["mem_len"]}


def feedback_forward(prepped, dec_inp, pos_emb, mems, layer_weight):
    memory_keys, memory_values = mems
    B, S, D = dec_inp.shape
    H, Dh = prepped["n_head"], prepped["d_head"]
    Km = memory_keys.shape[1]
    scale = 1.0 / (Dh ** 0.5)

    M = B * S
    x2d = dec_inp.reshape(M, D).astype(jnp.float32)
    if M > 512 and M % 256 != 0:
        # pad flattened rows so a multiple-of-8 row tile exists (keeps the pipeline); padded
        # rows never feed real rows and are sliced off at the end.
        x2d = _pad_rows(x2d, 256)

    lw = layer_weight.reshape(-1).astype(jnp.float32)                 # (L+1,)
    agg2d = lw[0] * x2d                                               # hiddens[0] contribution

    mem_k_b16 = memory_keys.astype(jnp.bfloat16)
    mem_v_b16 = memory_values.astype(jnp.bfloat16)
    pos_f32 = pos_emb.astype(jnp.float32)
    pos_mem = pos_f32[:Km]                                            # split once per forward
    pos_self = pos_f32[Km:Km + S]

    for li, lp in enumerate(prepped["layers"]):
        q, k_self, v_self = pallas_qkv_proj(x2d, lp["w_qkv_b16"], H, Dh)
        attn = pallas_attention(q, k_self, v_self, mem_k_b16, mem_v_b16,
                                pos_mem, pos_self, B, S, H, Dh, scale)
        x2d, agg2d = pallas_layer_epilogue(attn, x2d, agg2d, lw[li + 1:li + 2], lp)

    dec_outp = x2d[:M].reshape(B, S, D)
    agg_hiddens = agg2d[:M].reshape(B, S, D)

    # shared_kv_proj(agg_hiddens) -> new memory keys / values
    kv2d = pallas_matmul(agg2d, prepped["w_kv_b16"], out_dtype=jnp.float32)[:M]
    mem_k, mem_v = jnp.split(kv2d.reshape(B, S, 2 * Dh), 2, axis=-1)
    memory_keys = jnp.concatenate([memory_keys, mem_k], axis=1)[:, -prepped["mem_len"]:]
    memory_values = jnp.concatenate([memory_values, mem_v], axis=1)[:, -prepped["mem_len"]:]

    return {"output": dec_outp,
            "mems": (memory_keys, memory_values),
            "agg_hiddens": agg_hiddens}


def init_params(key, n_layer, n_head, d_model, d_head, d_inner, mem_len):
    def normal(k, shape, scale=0.02):
        return scale * jax.random.normal(k, shape, dtype=jnp.float32)

    keys = jax.random.split(key, n_layer * 4 + 1)
    layers = []
    for i in range(n_layer):
        k0, k1, k2, k3 = keys[4 * i: 4 * i + 4]
        layers.append({
            "w_q": normal(k0, (d_model, n_head * d_head)),
            "w_o": normal(k1, (n_head * d_head, d_model)),
            "w1": normal(k2, (d_model, d_inner)),
            "b1": jnp.zeros((d_inner,), jnp.float32),
            "w2": normal(k3, (d_inner, d_model)),
            "b2": jnp.zeros((d_model,), jnp.float32),
            "ln1_g": jnp.ones((d_model,), jnp.float32),
            "ln1_b": jnp.zeros((d_model,), jnp.float32),
            "ln2_g": jnp.ones((d_model,), jnp.float32),
            "ln2_b": jnp.zeros((d_model,), jnp.float32),
        })
    return {"layers": layers,
            "w_kv": normal(keys[-1], (d_model, 2 * d_head)),   # shared_kv_proj
            "n_head": n_head, "d_head": d_head, "mem_len": mem_len}


if __name__ == "__main__":
    B, S, D = 2, 8, 32
    n_layer, n_head, d_head, d_inner = 2, 2, 16, 64
    mem_len, mem_prev = 16, 8

    key = jax.random.PRNGKey(0)
    k_inp, k_pos, k_mk, k_mv, k_par = jax.random.split(key, 5)

    dec_inp = jax.random.normal(k_inp, (B, S, D), dtype=jnp.float32)
    pos_emb = jax.random.normal(k_pos, (mem_prev + S, d_head), dtype=jnp.float32)
    memory_keys = jax.random.normal(k_mk, (B, mem_prev, d_head), dtype=jnp.float32)
    memory_values = jax.random.normal(k_mv, (B, mem_prev, d_head), dtype=jnp.float32)

    params = init_params(k_par, n_layer, n_head, D, d_head, d_inner, mem_len)
    prepped = prepare_weights(params)   # weight concat/casts done once, outside the forward

    # layer_weight: Parameter ones(n_layer+1) -> softmax -> 'd -> d () () ()'
    layer_weight = jax.nn.softmax(jnp.ones((n_layer + 1,), jnp.float32)).reshape(
        n_layer + 1, 1, 1, 1)

    out = feedback_forward(prepped, dec_inp, pos_emb,
                           (memory_keys, memory_values), layer_weight)
    out = jax.block_until_ready(out)

    assert out["output"].shape == (B, S, D)
    assert out["agg_hiddens"].shape == (B, S, D)
    assert out["mems"][0].shape == (B, min(mem_prev + S, mem_len), d_head)
    assert out["mems"][1].shape == (B, min(mem_prev + S, mem_len), d_head)
    print("KERNEL_OK")
</pallas_src>

<mosaic_0001>
module attributes {stable_mosaic.version = 11 : i64} {
  func.func @_qkv_proj_kernel(%arg0: i32, %arg1: memref<16x32xf32, #tpu.memory_space<vmem>>, %arg2: memref<32x64xbf16, #tpu.memory_space<vmem>>, %arg3: memref<16x32xbf16, #tpu.memory_space<vmem>>, %arg4: memref<16x16xbf16, #tpu.memory_space<vmem>>, %arg5: memref<16x16xbf16, #tpu.memory_space<vmem>>) attributes {dimension_semantics = [#tpu.dimension_semantics<parallel>], iteration_bounds = array<i64: 1>, scalar_prefetch = 0 : i64, scratch_operands = 0 : i64, tpu.core_type = #tpu.core_type<tc>, window_params = [{transform_indices = @transform_0, window_bounds = array<i64: 16, 32>}, {pipeline_mode = #tpu.pipeline_mode<synchronous>, transform_indices = @transform_1, window_bounds = array<i64: 32, 64>}, {transform_indices = @transform_2, window_bounds = array<i64: 16, 32>}, {transform_indices = @transform_3, window_bounds = array<i64: 16, 16>}, {transform_indices = @transform_4, window_bounds = array<i64: 16, 16>}]} {
    %c0 = arith.constant 0 : index
    %c0_0 = arith.constant 0 : index
    %0 = vector.load %arg1[%c0, %c0_0] : memref<16x32xf32, #tpu.memory_space<vmem>>, vector<16x32xf32>
    %1 = arith.truncf %0 : vector<16x32xf32> to vector<16x32xbf16>
    %c0_1 = arith.constant 0 : index
    %c0_2 = arith.constant 0 : index
    %2 = vector.load %arg2[%c0_1, %c0_2] : memref<32x64xbf16, #tpu.memory_space<vmem>>, vector<32x64xbf16>
    %cst = arith.constant dense<0.000000e+00> : vector<16x64xf32>
    %3 = tpu.matmul %1, %2, %cst {dimension_numbers = #tpu.dot_dimension_numbers<[1], [0], [0], [1], [0, 0, 1, 1], [], []>} : vector<16x32xbf16>, vector<32x64xbf16>, vector<16x64xf32> -> vector<16x64xf32>
    %4 = vector.extract_strided_slice %3 {offsets = [0, 0], sizes = [16, 32], strides = [1, 1]} : vector<16x64xf32> to vector<16x32xf32>
    %5 = arith.truncf %4 : vector<16x32xf32> to vector<16x32xbf16>
    %c0_3 = arith.constant 0 : index
    %c0_4 = arith.constant 0 : index
    %6 = vector.load %arg3[%c0_3, %c0_4] : memref<16x32xbf16, #tpu.memory_space<vmem>>, vector<16x32xbf16>
    tpu.vector_store %arg3[%c0_3, %c0_4], %5 {strides = array<i32>} : memref<16x32xbf16, #tpu.memory_space<vmem>>, vector<16x32xbf16>,
    %7 = vector.extract_strided_slice %3 {offsets = [0, 32], sizes = [16, 16], strides = [1, 1]} : vector<16x64xf32> to vector<16x16xf32>
    %8 = arith.truncf %7 : vector<16x16xf32> to vector<16x16xbf16>
    %c0_5 = arith.constant 0 : index
    %c0_6 = arith.constant 0 : index
    %9 = vector.load %arg4[%c0_5, %c0_6] : memref<16x16xbf16, #tpu.memory_space<vmem>>, vector<16x16xbf16>
    tpu.vector_store %arg4[%c0_5, %c0_6], %8 {strides = array<i32>} : memref<16x16xbf16, #tpu.memory_space<vmem>>, vector<16x16xbf16>,
    %10 = vector.extract_strided_slice %3 {offsets = [0, 48], sizes = [16, 16], strides = [1, 1]} : vector<16x64xf32> to vector<16x16xf32>
    %11 = arith.truncf %10 : vector<16x16xf32> to vector<16x16xbf16>
    %c0_7 = arith.constant 0 : index
    %c0_8 = arith.constant 0 : index
    %12 = vector.load %arg5[%c0_7, %c0_8] : memref<16x16xbf16, #tpu.memory_space<vmem>>, vector<16x16xbf16>
    tpu.vector_store %arg5[%c0_7, %c0_8], %11 {strides = array<i32>} : memref<16x16xbf16, #tpu.memory_space<vmem>>, vector<16x16xbf16>,
    return
  }
  func.func @transform_0(%arg0: i32) -> (i32, i32) {
    %c0_i32 = arith.constant 0 : i32
    %c0_i32_0 = arith.constant 0 : i32
    return %arg0, %c0_i32 : i32, i32
  }
  func.func @transform_1(%arg0: i32) -> (i32, i32) {
    %c0_i32 = arith.constant 0 : i32
    %c0_i32_0 = arith.constant 0 : i32
    %c0_i32_1 = arith.constant 0 : i32
    return %c0_i32, %c0_i32_0 : i32, i32
  }
  func.func @transform_2(%arg0: i32) -> (i32, i32) {
    %c0_i32 = arith.constant 0 : i32
    %c0_i32_0 = arith.constant 0 : i32
    return %arg0, %c0_i32 : i32, i32
  }
  func.func @transform_3(%arg0: i32) -> (i32, i32) {
    %c0_i32 = arith.constant 0 : i32
    %c0_i32_0 = arith.constant 0 : i32
    return %arg0, %c0_i32 : i32, i32
  }
  func.func @transform_4(%arg0: i32) -> (i32, i32) {
    %c0_i32 = arith.constant 0 : i32
    %c0_i32_0 = arith.constant 0 : i32
    return %arg0, %c0_i32 : i32, i32
  }
}

</mosaic_0001>

<llo_original>
// kernel: tpu_custom_call.1
$region0: #{tpu_custom_call.1}
  #allocation0 [shape = 'u32[]', space=smem, size = 0x4, offset = 0x4, fixed_abs, tag = 'smem constant byte address 0x4 - core index']
  #allocation1 [shape = 'u32[144,128]{1,0:T(1,128)}', space=vmem, size = 0x12000, scoped, tag = 'internal scratch']
  %s0 = inlined_call_operand.hbm [shape: f32[16,32], index: 0, kind: input, shape index: {}]
  %s1 = inlined_call_operand.hbm [shape: bf16[32,64], index: 1, kind: input, shape index: {}]
  %s2 = inlined_call_operand.hbm [shape: bf16[16,32], index: 2, kind: output, shape index: {0}]
  %s3 = inlined_call_operand.hbm [shape: bf16[16,16], index: 3, kind: output, shape index: {1}]
  %s4 = inlined_call_operand.hbm [shape: bf16[16,16], index: 4, kind: output, shape index: {2}]
  %5 = xla_tuple %s2, %s3, %s4
  %s6 = sld [smem:[#allocation0]]
  $region42: #{tpu_custom_call.1} parent=0
    _
  %s8 = ssub.s32 1, %s6
  %s9 = scalar_select 0, %s8, %s6
  $region1: #{tpu_custom_call.1} parent=0
    #allocation2 [shape = 'u8[8192]{0}', space=vmem, size = 0x2000, scoped, tag = 'input window, operand 0, single buffered']
    #allocation3 [shape = 's32[1]{0}', space=sflag, size = 0x4, scoped, tag = 'scoped memory for tpu_custom_call.1']
    #allocation4 [shape = 's32[1]{0}', space=sflag, size = 0x4, scoped, tag = 'scoped memory for tpu_custom_call.1']
    #allocation5 [shape = 'u8[8192]{0}', space=vmem, size = 0x2000, scoped, tag = 'input window, operand 1, single buffered']
    #allocation6 [shape = 's32[1]{0}', space=sflag, size = 0x4, scoped, tag = 'scoped memory for tpu_custom_call.1']
    #allocation7 [shape = 'u8[4096]{0}', space=vmem, size = 0x1000, scoped, tag = 'output window, operand 0, single buffered']
    #allocation8 [shape = 'u8[4096]{0}', space=vmem, size = 0x1000, scoped, tag = 'output window, operand 1, single buffered']
    #allocation9 [shape = 's32[1]{0}', space=sflag, size = 0x4, scoped, tag = 'scoped memory for tpu_custom_call.1']
    #allocation10 [shape = 'u8[4096]{0}', space=vmem, size = 0x1000, scoped, tag = 'output window, operand 2, single buffered']
    %10 = vsyncpa [#allocation3], 0
    %11 = vsyncpa [#allocation6], 0
    %12 = vsyncpa [#allocation4], 0
    %13 = vsyncpa [#allocation9], 0
    // Predicated region
    $region2: #{tpu_custom_call.1} parent=1 // pred_check
      _
    $region3: #{tpu_custom_call.1} parent=1 // pred_check_branch
      %15 = sbr.rel (0) target = $region5
    $region4: #{tpu_custom_call.1} parent=1 // pred_region
      %s17 = ssub.s32 256, 256
      %18 = vsyncadd [#allocation3], %s17
      %s19 = sshll.u32 [#allocation2], 4
      %s20 = int_to_ptr.vmem [resolvable:$true] %s19
      %25 = dma.hbm_to_vmem [thread:$0]  %s0, 256, %s20, [#allocation3], 128, 128, 8
    $region5: #{tpu_custom_call.1} parent=1 // pred_fallthru
      _
    // Predicated region
    $region6: #{tpu_custom_call.1} parent=1 // pred_check
      _
    $region7: #{tpu_custom_call.1} parent=1 // pred_check_branch
      %27 = sbr.rel (0) target = $region9
    $region8: #{tpu_custom_call.1} parent=1 // pred_region
      %s29 = ssub.s32 256, 256
      %30 = vsyncadd [#allocation6], %s29
      %s31 = sshll.u32 [#allocation5], 4
      %s32 = int_to_ptr.vmem [resolvable:$true] %s31
      %37 = dma.hbm_to_vmem [thread:$0]  %s1, 256, %s32, [#allocation6], 64, 64, 4
    $region9: #{tpu_custom_call.1} parent=1 // pred_fallthru
      _
    // Predicated region
    $region10: #{tpu_custom_call.1} parent=1 // pred_check
      _
    $region11: #{tpu_custom_call.1} parent=1 // pred_check_branch
      %39 = sbr.rel (0) target = $region13
    $region12: #{tpu_custom_call.1} parent=1 // pred_region
      %40 = dma.done [#allocation3], 256
    $region13: #{tpu_custom_call.1} parent=1 // pred_fallthru
      _
    // Predicated region
    $region14: #{tpu_custom_call.1} parent=1 // pred_check
      _
    $region15: #{tpu_custom_call.1} parent=1 // pred_check_branch
      %42 = sbr.rel (0) target = $region17
    $region16: #{tpu_custom_call.1} parent=1 // pred_region
      %43 = dma.done [#allocation6], 256
    $region17: #{tpu_custom_call.1} parent=1 // pred_fallthru
      _
    %v45 = vld [vmem:[#allocation2] sm:$0xff]
    %v46 = vld [vmem:[#allocation2 + $0x8] sm:$0xff]
    %v47 = vpack.c.bf16 %v46, %v45
    %v48 = vld [vmem:[#allocation5] sm:$0xf]
    %v49 = vld [vmem:[#allocation5 + $0x4] sm:$0xf]
    %v50 = vld [vmem:[#allocation5 + $0x8] sm:$0xf]
    %v51 = vld [vmem:[#allocation5 + $0xc] sm:$0xf]
    %v56 = vunpack.c.l.b16 %v48
    %v57 = vunpack.c.l.b16 %v49
    %v58 = vunpack.c.l.b16 %v50
    %v59 = vunpack.c.l.b16 %v51
    %v60 = vpack.c.b16 %v57, %v56
    %v61 = vpack.c.b16 %v59, %v58
    %vm64 = vcmask 261120
    %v66 = vsel %vm64, %v47, 0
    %68 = vmatprep.subr.bf16.mxu0 0
    %69 = vmatpush1.bf16.msra.mxu0 %v60
    %70 = vmatprep.subr.bf16.mxu0 0
    %71 = vmatpush1.bf16.msra.mxu0 %v61
    %72 = vmatprep.subr.bf16.mxu0 0
    %73 = vmatpush1.bf16.msra.mxu0 0
    %74 = vmatprep.subr.bf16.mxu0 0
    %75 = vmatpush1.bf16.msra.mxu0 0
    %76 = vmatprep.subr.bf16.mxu0 0
    %77 = vmatpush1.bf16.msra.mxu0 0
    %78 = vmatprep.subr.bf16.mxu0 0
    %79 = vmatpush1.bf16.msra.mxu0 0
    %80 = vmatprep.subr.bf16.mxu0 0
    %81 = vmatpush1.bf16.msra.mxu0 0
    %82 = vmatprep.subr.bf16.mxu0 0
    %83 = vmatpush1.bf16.msra.mxu0 0
    %84 = vmatprep.subr.bf16.mxu0 0
    %85 = vmatpush1.bf16.msra.mxu0 0
    %86 = vmatprep.subr.bf16.mxu0 0
    %87 = vmatpush1.bf16.msra.mxu0 0
    %88 = vmatprep.subr.bf16.mxu0 0
    %89 = vmatpush1.bf16.msra.mxu0 0
    %90 = vmatprep.subr.bf16.mxu0 0
    %91 = vmatpush1.bf16.msra.mxu0 0
    %92 = vmatprep.subr.bf16.mxu0 0
    %93 = vmatpush1.bf16.msra.mxu0 0
    %94 = vmatprep.subr.bf16.mxu0 0
    %95 = vmatpush1.bf16.msra.mxu0 0
    %96 = vmatprep.subr.bf16.mxu0 0
    %97 = vmatpush1.bf16.msra.mxu0 0
    %98 = vmatprep.subr.bf16.mxu0 0
    %99 = vmatpush1.bf16.msra.mxu0 0
    %100 = vmatprep.mubr.bf16.mxu0 0
    %101 = vmatmul.mubr.bf16.gmra.mrb[0].mxu0 %v66
    %v102 = vpop.f32.mrb[0].mxu0
    %v103 = vadd.f32 0.0, %v102
    %v104 = vpop.f32.mrb[0].mxu0
    %v105 = vpop.f32.mrb[0].mxu0
    %v106 = vadd.f32 0.0, %v105
    %v107 = vpop.f32.mrb[0].mxu0
    %108 = vdwg.mxu0
    %v109 = vpack.c.bf16 %v106, %v103
    %v111 = vunpack.c.l.b16 %v109
    %v112 = vunpack.c.h.b16 %v109
    %v113 = vpack.c.b16 %v111, %v111
    %v114 = vpack.c.b16 %v112, %v112
    %vm117 = vcmask 257024
    %118 = vst.msk [vmem:[#allocation7] sm:$0xf] %vm117, %v113
    %119 = vst.msk [vmem:[#allocation7 + $0x4] sm:$0xf] %vm117, %v114
    %120 = vrot.lane.b32.xlu0 %v113, 96
    %v121 = vpop.permute.xlu0 %120
    %122 = vrot.lane.b32.xlu0 %v114, 96
    %v123 = vpop.permute.xlu0 %122
    %vm126 = vcmask 125952
    %127 = vst.msk [vmem:[#allocation8] sm:$0xf] %vm126, %v121
    %128 = vst.msk [vmem:[#allocation8 + $0x4] sm:$0xf] %vm126, %v123
    %129 = vrot.lane.b32.xlu0 %v113, 80
    %v130 = vpop.permute.xlu0 %129
    %131 = vrot.lane.b32.xlu0 %v114, 80
    %v132 = vpop.permute.xlu0 %131
    %135 = vst.msk [vmem:[#allocation10] sm:$0xf] %vm126, %v130
    %136 = vst.msk [vmem:[#allocation10 + $0x4] sm:$0xf] %vm126, %v132
    // Predicated region
    $region18: #{tpu_custom_call.1} parent=1 // pred_check
      _
    $region19: #{tpu_custom_call.1} parent=1 // pred_check_branch
      %138 = sbr.rel (0) target = $region21
    $region20: #{tpu_custom_call.1} parent=1 // pred_region
      %s140 = ssub.s32 128, 128
      %141 = vsyncadd [#allocation4], %s140
      %s142 = sshll.u32 [#allocation7], 4
      %s143 = int_to_ptr.vmem [resolvable:$true] %s142
      %148 = dma.vmem_to_hbm [thread:$0]  %s143, 128, %s2, [#allocation4], 64, 64, 4
    $region21: #{tpu_custom_call.1} parent=1 // pred_fallthru
      _
    // Predicated region
    $region22: #{tpu_custom_call.1} parent=1 // pred_check
      _
    $region23: #{tpu_custom_call.1} parent=1 // pred_check_branch
      %150 = sbr.rel (0) target = $region25
    $region24: #{tpu_custom_call.1} parent=1 // pred_region
      %s152 = ssub.s32 128, 128
      %153 = vsyncadd [#allocation9], %s152
      %s154 = sshll.u32 [#allocation8], 4
      %s155 = int_to_ptr.vmem [resolvable:$true] %s154
      %160 = dma.vmem_to_hbm [thread:$0]  %s155, 128, %s3, [#allocation9], 64, 64, 4
    $region25: #{tpu_custom_call.1} parent=1 // pred_fallthru
      _
    // Predicated region
    $region26: #{tpu_custom_call.1} parent=1 // pred_check
      _
    $region27: #{tpu_custom_call.1} parent=1 // pred_check_branch
      %162 = sbr.rel (0) target = $region29
    $region28: #{tpu_custom_call.1} parent=1 // pred_region
      %s164 = ssub.s32 128, 128
      %165 = vsyncadd [#allocation9], %s164
      %s166 = sshll.u32 [#allocation10], 4
      %s167 = int_to_ptr.vmem [resolvable:$true] %s166
      %172 = dma.vmem_to_hbm [thread:$0]  %s167, 128, %s4, [#allocation9], 64, 64, 4
    $region29: #{tpu_custom_call.1} parent=1 // pred_fallthru
      _
    // Predicated region
    $region30: #{tpu_custom_call.1} parent=1 // pred_check
      _
    $region31: #{tpu_custom_call.1} parent=1 // pred_check_branch
      %174 = sbr.rel (0) target = $region33
    $region32: #{tpu_custom_call.1} parent=1 // pred_region
      %175 = dma.done [#allocation4], 128
    $region33: #{tpu_custom_call.1} parent=1 // pred_fallthru
      _
    // Predicated region
    $region34: #{tpu_custom_call.1} parent=1 // pred_check
      _
    $region35: #{tpu_custom_call.1} parent=1 // pred_check_branch
      %177 = sbr.rel (0) target = $region37
    $region36: #{tpu_custom_call.1} parent=1 // pred_region
      %178 = dma.done [#allocation9], 128
    $region37: #{tpu_custom_call.1} parent=1 // pred_fallthru
      _
    // Predicated region
    $region38: #{tpu_custom_call.1} parent=1 // pred_check
      _
    $region39: #{tpu_custom_call.1} parent=1 // pred_check_branch
      %180 = sbr.rel (0) target = $region41
    $region40: #{tpu_custom_call.1} parent=1 // pred_region
      %181 = dma.done [#allocation9], 128
    $region41: #{tpu_custom_call.1} parent=1 // pred_fallthru
      _
    %182 = vsyncpa [#allocation3], 1
    %183 = vsyncpa [#allocation6], 1
    %184 = vsyncpa [#allocation4], 1
    %185 = vsyncpa [#allocation9], 1

</llo_original>
